<compile_context>
chip_gen: v7x
topology: tpu7x:2x2x1
jax: 0.10.0
libtpu: 0.0.40
codegen_flags: <defaults>
</compile_context>

<pallas_src>
import functools

import jax
import jax.numpy as jnp
import numpy as np
from jax.experimental import pallas as pl
from jax.experimental.pallas import tpu as pltpu


def _round_up(x, m):
    return ((x + m - 1) // m) * m


# ----------------------------- Pallas kernel ---------------------------------

def _self_attn_kernel(x_ref, w_ref, b_ref, gamma_ref, out_ref, *,
                      n_valid, qk_pad, bb):
    """x_ref:     (bb, N_pad, C_pad)  zero-padded input (rows >= n_valid, chans >= C are 0)
       w_ref:     (C_pad, 2*qk_pad + C_pad)   fused [Wq | Wk | Wv], zero-padded
       b_ref:     (1, 2*qk_pad + C_pad)       fused [bq | bk | bv], zero-padded
       gamma_ref: (1, 1)
       out_ref:   (bb, N_pad, C_pad)          lane-dense output
    """
    w = w_ref[...]
    bias = b_ref[...]
    gamma = gamma_ref[0, 0]
    n_pad = x_ref.shape[1]

    for b in range(bb):   # static loop -> block-diagonal attention per batch element
        x = x_ref[b]                                                      # (N_pad, C_pad) f32

        # one fused projection matmul (MXU), then 128-aligned lane slices
        qkv = jnp.dot(x, w, preferred_element_type=jnp.float32) + bias    # (N_pad, 2*qk_pad+C_pad)
        q = qkv[:, :qk_pad]
        k = qkv[:, qk_pad:2 * qk_pad]
        v = qkv[:, 2 * qk_pad:]

        # energy[i, j] = <q_i, k_j>  -- contract last dims in place (no explicit k.T)
        energy = jax.lax.dot_general(q, k, (((1,), (1,)), ((), ())),
                                     preferred_element_type=jnp.float32)  # (N_pad, N_pad)
        if n_pad > n_valid:   # static branch: mask padded key columns
            col = jax.lax.broadcasted_iota(jnp.int32, (n_pad, n_pad), 1)
            energy = jnp.where(col < n_valid, energy, -1e30)

        # numerically-stable softmax over keys (f32 VPU/EUP math)
        m = jnp.max(energy, axis=-1, keepdims=True)
        p = jnp.exp(energy - m)
        inv_l = pl.reciprocal(jnp.sum(p, axis=-1, keepdims=True), approx=True)
        attn = p * inv_l                                                  # (N_pad, N_pad)

        # attn @ v on the MXU in bf16 with f32 accumulation
        ctx = jnp.dot(attn.astype(jnp.bfloat16), v.astype(jnp.bfloat16),
                      preferred_element_type=jnp.float32)                 # (N_pad, C_pad)

        out_ref[b] = (gamma * ctx + x).astype(out_ref.dtype)


def self_attn_pallas(x_nchw, wq, bq, wk, bk, wv, bv, gamma):
    """SAGAN self-attention forward. x_nchw: (B, C, W, H) f32 -> (B, C, W, H) f32.
    wq/wk: (C, C//8), wv: (C, C)  (== 1x1 conv weight[:, :, 0, 0].T), biases 1-D."""
    B, C, W, H = x_nchw.shape
    N = W * H
    Cq = wq.shape[1]

    C_p = _round_up(C, 128)      # lane-dense channels for loads/stores
    QKP = _round_up(Cq, 128)     # lane-aligned q/k width inside the fused projection
    N_pad = _round_up(N, 8)      # sublane-aligned spatial axis
    QKVW = 2 * QKP + C_p

    # NCHW -> (B, N, C) -> zero-pad to (B, N_pad, C_p)
    x_bnc = jnp.transpose(x_nchw.reshape(B, C, N), (0, 2, 1)).astype(jnp.float32)
    x_p = jnp.zeros((B, N_pad, C_p), jnp.float32).at[:, :N, :C].set(x_bnc)

    # fused, zero-padded [Wq | Wk | Wv] and [bq | bk | bv]
    w_f = jnp.zeros((C_p, QKVW), jnp.float32)
    w_f = w_f.at[:C, :Cq].set(wq.astype(jnp.float32))
    w_f = w_f.at[:C, QKP:QKP + Cq].set(wk.astype(jnp.float32))
    w_f = w_f.at[:C, 2 * QKP:2 * QKP + C].set(wv.astype(jnp.float32))
    b_f = jnp.zeros((1, QKVW), jnp.float32)
    b_f = b_f.at[0, :Cq].set(bq.astype(jnp.float32))
    b_f = b_f.at[0, QKP:QKP + Cq].set(bk.astype(jnp.float32))
    b_f = b_f.at[0, 2 * QKP:2 * QKP + C].set(bv.astype(jnp.float32))
    gamma2 = jnp.asarray(gamma, jnp.float32).reshape(1, 1)

    # fold as many batches as comfortably fit VMEM into one grid step
    # (amortizes the ~0.35 us/step pipeline overhead at tiny N, C)
    per_batch_bytes = 4 * (2 * N_pad * C_p + N_pad * QKVW + 2 * N_pad * N_pad)
    budget_bytes = 8 * 1024 * 1024
    bb = max(1, min(B, budget_bytes // max(per_batch_bytes, 1)))
    while B % bb:
        bb -= 1

    kernel = functools.partial(_self_attn_kernel, n_valid=N, qk_pad=QKP, bb=bb)

    out_p = pl.pallas_call(
        kernel,
        out_shape=jax.ShapeDtypeStruct((B, N_pad, C_p), jnp.float32),
        grid_spec=pltpu.PrefetchScalarGridSpec(
            num_scalar_prefetch=0,
            grid=(B // bb,),
            in_specs=[
                pl.BlockSpec((bb, N_pad, C_p), lambda i: (i, 0, 0)),   # x (padded, lane-dense)
                pl.BlockSpec((C_p, QKVW), lambda i: (0, 0)),           # fused W_qkv
                pl.BlockSpec((1, QKVW), lambda i: (0, 0)),             # fused b_qkv
                pl.BlockSpec((1, 1), lambda i: (0, 0)),                # gamma
            ],
            out_specs=pl.BlockSpec((bb, N_pad, C_p), lambda i: (i, 0, 0)),
        ),
        compiler_params=pltpu.CompilerParams(
            dimension_semantics=("parallel",)),
    )(x_p, w_f, b_f, gamma2)

    # strip padding, back to NCHW
    return jnp.transpose(out_p[:, :N, :C], (0, 2, 1)).reshape(B, C, W, H)


# ------------------------- pure-JAX references / glue -------------------------

def self_attn_ref(x_nchw, wq, bq, wk, bk, wv, bv, gamma):
    """Pure-JAX reference mirroring the PyTorch Self_Attn.forward exactly."""
    B, C, W, H = x_nchw.shape
    N = W * H
    hp = jax.lax.Precision.HIGHEST
    xf = x_nchw.reshape(B, C, N)
    q = jnp.einsum('bcn,cq->bnq', xf, wq, precision=hp) + bq[None, None, :]   # (B, N, Cq)
    k = jnp.einsum('bcn,cq->bqn', xf, wk, precision=hp) + bk[None, :, None]   # (B, Cq, N)
    energy = jnp.einsum('bnq,bqm->bnm', q, k, precision=hp)                   # (B, N, N)
    attn = jax.nn.softmax(energy, axis=-1)
    v = jnp.einsum('bcn,cv->bvn', xf, wv, precision=hp) + bv[None, :, None]   # (B, C, N)
    out = jnp.einsum('bvn,bmn->bvm', v, attn, precision=hp)                   # (B, C, N)
    return gamma * out.reshape(B, C, W, H) + x_nchw


def _conv2d(x, w, b, stride, pad):
    y = jax.lax.conv_general_dilated(
        x, w, window_strides=(stride, stride),
        padding=((pad, pad), (pad, pad)),
        dimension_numbers=('NCHW', 'OIHW', 'NCHW'))
    if b is not None:
        y = y + b[None, :, None, None]
    return y


def _leaky_relu(x):
    return jnp.where(x >= 0, x, 0.2 * x)


def build_discriminator_params(key, input_nc, n_filters, num_downs):
    """Mirrors Discriminator(input_nc, n_filters, num_downs, sn=True, sa=True, norm_layer='none').
    norm_layer='none' -> nn.Identity -> use_bias=False for the intermediate convs.
    # TODO(synk): spectral_normalization is an init-time weight reparametrization (not a
    # forward-pass op); the deterministic synthetic weights here stand in for the
    # already-normalized conv weights."""
    ki = iter(jax.random.split(key, 64))

    def conv_p(cin, cout, bias):
        w = jax.random.normal(next(ki), (cout, cin, 4, 4), jnp.float32) * 0.05
        b = (jax.random.normal(next(ki), (cout,), jnp.float32) * 0.05) if bias else None
        return w, b

    def attn_p(c):
        cq = max(c // 8, 1)
        return dict(
            wq=jax.random.normal(next(ki), (c, cq), jnp.float32) * 0.1,
            bq=jax.random.normal(next(ki), (cq,), jnp.float32) * 0.1,
            wk=jax.random.normal(next(ki), (c, cq), jnp.float32) * 0.1,
            bk=jax.random.normal(next(ki), (cq,), jnp.float32) * 0.1,
            wv=jax.random.normal(next(ki), (c, c), jnp.float32) * 0.1,
            bv=jax.random.normal(next(ki), (c,), jnp.float32) * 0.1,
            # torch init is gamma=0 (attention branch disabled -> trivially out==x);
            # use a nonzero deterministic gamma to actually exercise the attention path.
            gamma=jnp.float32(0.5),
        )

    use_bias = False
    layers = [('conv', *conv_p(input_nc, n_filters, True), 2, 1), ('lrelu',)]
    nf_mult = 1
    for n in range(1, num_downs):
        nf_prev, nf_mult = nf_mult, min(2 ** n, 8)
        layers += [('conv', *conv_p(n_filters * nf_prev, n_filters * nf_mult, use_bias), 2, 1),
                   ('lrelu',)]
    layers.append(('attn', attn_p(n_filters * nf_mult)))
    nf_prev, nf_mult = nf_mult, min(2 ** num_downs, 8)
    layers += [('conv', *conv_p(n_filters * nf_prev, n_filters * nf_mult, use_bias), 2, 1),
               ('lrelu',)]
    layers.append(('attn', attn_p(n_filters * nf_mult)))
    layers.append(('conv', *conv_p(n_filters * nf_mult, 1, True), 1, 0))
    return layers


def discriminator_forward(layers, x, attn_fn):
    for layer in layers:
        kind = layer[0]
        if kind == 'conv':
            _, w, b, stride, pad = layer
            x = _conv2d(x, w, b, stride, pad)
        elif kind == 'lrelu':
            x = _leaky_relu(x)
        else:  # 'attn'
            p = layer[1]
            x = attn_fn(x, p['wq'], p['bq'], p['wk'], p['bk'],
                        p['wv'], p['bv'], p['gamma'])
    return x


# ----------------------------------- test -------------------------------------

if __name__ == "__main__":
    key = jax.random.PRNGKey(0)
    k_attn_x, k_attn_p, k_disc_x, k_disc_p = jax.random.split(key, 4)

    # --- 1) standalone Self_Attn kernel vs pure-JAX reference ---
    B, C, W, H = 2, 16, 8, 8          # in_dim=16 -> q/k project to 16 // 8 = 2 channels
    Cq = C // 8
    x = jax.random.normal(k_attn_x, (B, C, W, H), jnp.float32)
    kp = list(jax.random.split(k_attn_p, 6))
    wq = jax.random.normal(kp[0], (C, Cq), jnp.float32) * 0.1
    bq = jax.random.normal(kp[1], (Cq,), jnp.float32) * 0.1
    wk = jax.random.normal(kp[2], (C, Cq), jnp.float32) * 0.1
    bk = jax.random.normal(kp[3], (Cq,), jnp.float32) * 0.1
    wv = jax.random.normal(kp[4], (C, C), jnp.float32) * 0.1
    bv = jax.random.normal(kp[5], (C,), jnp.float32) * 0.1
    gamma = jnp.float32(0.5)

    out = jax.block_until_ready(self_attn_pallas(x, wq, bq, wk, bk, wv, bv, gamma))
    out_ref = self_attn_ref(x, wq, bq, wk, bk, wv, bv, gamma)
    assert out.shape == (B, C, W, H)
    # bf16-fed attn@v (f32 accumulate) + approx reciprocal -> loosened tolerance
    np.testing.assert_allclose(np.asarray(out), np.asarray(out_ref), rtol=2e-2, atol=2e-2)

    # --- 2) full Discriminator(input_nc=3, n_filters=8, num_downs=2, sa=True, norm='none') ---
    x_in = jax.random.normal(k_disc_x, (2, 3, 32, 32), jnp.float32)
    layers = build_discriminator_params(k_disc_p, input_nc=3, n_filters=8, num_downs=2)
    y = jax.block_until_ready(discriminator_forward(layers, x_in, self_attn_pallas))
    y_ref = discriminator_forward(layers, x_in, self_attn_ref)
    assert y.shape == (2, 1, 1, 1)
    np.testing.assert_allclose(np.asarray(y), np.asarray(y_ref), rtol=3e-2, atol=3e-2)

    print("KERNEL_OK")
</pallas_src>

<mosaic_0001>
module attributes {stable_mosaic.version = 11 : i64} {
  func.func @_self_attn_kernel(%arg0: i32, %arg1: memref<2x64x128xf32, #tpu.memory_space<vmem>>, %arg2: memref<128x384xf32, #tpu.memory_space<vmem>>, %arg3: memref<1x384xf32, #tpu.memory_space<vmem>>, %arg4: memref<1x1xf32, #tpu.memory_space<vmem>>, %arg5: memref<2x64x128xf32, #tpu.memory_space<vmem>>) attributes {dimension_semantics = [#tpu.dimension_semantics<parallel>], iteration_bounds = array<i64: 1>, scalar_prefetch = 0 : i64, scratch_operands = 0 : i64, tpu.core_type = #tpu.core_type<tc>, window_params = [{transform_indices = @transform_0, window_bounds = array<i64: 2, 64, 128>}, {pipeline_mode = #tpu.pipeline_mode<synchronous>, transform_indices = @transform_1, window_bounds = array<i64: 128, 384>}, {pipeline_mode = #tpu.pipeline_mode<synchronous>, transform_indices = @transform_2, window_bounds = array<i64: 1, 384>}, {pipeline_mode = #tpu.pipeline_mode<synchronous>, transform_indices = @transform_3, window_bounds = array<i64: 1, 1>}, {transform_indices = @transform_4, window_bounds = array<i64: 2, 64, 128>}]} {
    %c0 = arith.constant 0 : index
    %c0_0 = arith.constant 0 : index
    %0 = vector.load %arg2[%c0, %c0_0] : memref<128x384xf32, #tpu.memory_space<vmem>>, vector<128x384xf32>
    %c0_1 = arith.constant 0 : index
    %c0_2 = arith.constant 0 : index
    %1 = vector.load %arg3[%c0_1, %c0_2] : memref<1x384xf32, #tpu.memory_space<vmem>>, vector<1x384xf32>
    %c0_3 = arith.constant 0 : index
    %c0_4 = arith.constant 0 : index
    %2 = vector.load %arg4[%c0_3, %c0_4] : memref<1x1xf32, #tpu.memory_space<vmem>>, vector<1x1xf32>
    %3 = vector.extract %2[0, 0] : f32 from vector<1x1xf32>
    %c0_5 = arith.constant 0 : index
    %c0_6 = arith.constant 0 : index
    %c0_7 = arith.constant 0 : index
    %4 = vector.load %arg1[%c0_5, %c0_6, %c0_7] : memref<2x64x128xf32, #tpu.memory_space<vmem>>, vector<1x64x128xf32>
    %5 = vector.shape_cast %4 : vector<1x64x128xf32> to vector<64x128xf32>
    %cst = arith.constant dense<0.000000e+00> : vector<64x384xf32>
    %6 = tpu.matmul %5, %0, %cst {dimension_numbers = #tpu.dot_dimension_numbers<[1], [0], [0], [1], [0, 0, 1, 1], [], []>} : vector<64x128xf32>, vector<128x384xf32>, vector<64x384xf32> -> vector<64x384xf32>
    %7 = vector.broadcast %1 : vector<1x384xf32> to vector<64x384xf32>
    %8 = arith.addf %6, %7 : vector<64x384xf32>
    %9 = vector.extract_strided_slice %8 {offsets = [0, 0], sizes = [64, 128], strides = [1, 1]} : vector<64x384xf32> to vector<64x128xf32>
    %10 = vector.extract_strided_slice %8 {offsets = [0, 128], sizes = [64, 128], strides = [1, 1]} : vector<64x384xf32> to vector<64x128xf32>
    %11 = vector.extract_strided_slice %8 {offsets = [0, 256], sizes = [64, 128], strides = [1, 1]} : vector<64x384xf32> to vector<64x128xf32>
    %cst_8 = arith.constant dense<0.000000e+00> : vector<64x64xf32>
    %12 = tpu.matmul %9, %10, %cst_8 {dimension_numbers = #tpu.dot_dimension_numbers<[1], [1], [0], [0], [0, 0, 1, 0], [], []>} : vector<64x128xf32>, vector<64x128xf32>, vector<64x64xf32> -> vector<64x64xf32>
    %cst_9 = arith.constant dense<0xFF800000> : vector<64xf32>
    %13 = vector.multi_reduction <maximumf>, %12, %cst_9 [1] : vector<64x64xf32> to vector<64xf32>
    %14 = vector.shape_cast %13 : vector<64xf32> to vector<64x1xf32>
    %15 = vector.broadcast %14 : vector<64x1xf32> to vector<64x64xf32>
    %16 = arith.subf %12, %15 : vector<64x64xf32>
    %17 = math.exp %16 : vector<64x64xf32>
    %cst_10 = arith.constant dense<0.000000e+00> : vector<64xf32>
    %18 = vector.multi_reduction <add>, %17, %cst_10 [1] : vector<64x64xf32> to vector<64xf32>
    %19 = vector.shape_cast %18 : vector<64xf32> to vector<64x1xf32>
    %20 = tpu.reciprocal %19 {approx = true} : vector<64x1xf32> -> vector<64x1xf32>
    %21 = vector.broadcast %20 : vector<64x1xf32> to vector<64x64xf32>
    %22 = arith.mulf %17, %21 : vector<64x64xf32>
    %23 = arith.truncf %22 : vector<64x64xf32> to vector<64x64xbf16>
    %24 = arith.truncf %11 : vector<64x128xf32> to vector<64x128xbf16>
    %cst_11 = arith.constant dense<0.000000e+00> : vector<64x128xf32>
    %25 = tpu.matmul %23, %24, %cst_11 {dimension_numbers = #tpu.dot_dimension_numbers<[1], [0], [0], [1], [0, 0, 1, 1], [], []>} : vector<64x64xbf16>, vector<64x128xbf16>, vector<64x128xf32> -> vector<64x128xf32>
    %26 = vector.broadcast %3 : f32 to vector<64x128xf32>
    %27 = arith.mulf %26, %25 : vector<64x128xf32>
    %28 = arith.addf %27, %5 : vector<64x128xf32>
    %c0_12 = arith.constant 0 : index
    %c0_13 = arith.constant 0 : index
    %c0_14 = arith.constant 0 : index
    %29 = vector.load %arg5[%c0_12, %c0_13, %c0_14] : memref<2x64x128xf32, #tpu.memory_space<vmem>>, vector<1x64x128xf32>
    %30 = vector.shape_cast %29 : vector<1x64x128xf32> to vector<64x128xf32>
    %31 = vector.shape_cast %28 : vector<64x128xf32> to vector<1x64x128xf32>
    tpu.vector_store %arg5[%c0_12, %c0_13, %c0_14], %31 {strides = array<i32>} : memref<2x64x128xf32, #tpu.memory_space<vmem>>, vector<1x64x128xf32>,
    %c1 = arith.constant 1 : index
    %c0_15 = arith.constant 0 : index
    %c0_16 = arith.constant 0 : index
    %32 = vector.load %arg1[%c1, %c0_15, %c0_16] : memref<2x64x128xf32, #tpu.memory_space<vmem>>, vector<1x64x128xf32>
    %33 = vector.shape_cast %32 : vector<1x64x128xf32> to vector<64x128xf32>
    %cst_17 = arith.constant dense<0.000000e+00> : vector<64x384xf32>
    %34 = tpu.matmul %33, %0, %cst_17 {dimension_numbers = #tpu.dot_dimension_numbers<[1], [0], [0], [1], [0, 0, 1, 1], [], []>} : vector<64x128xf32>, vector<128x384xf32>, vector<64x384xf32> -> vector<64x384xf32>
    %35 = vector.broadcast %1 : vector<1x384xf32> to vector<64x384xf32>
    %36 = arith.addf %34, %35 : vector<64x384xf32>
    %37 = vector.extract_strided_slice %36 {offsets = [0, 0], sizes = [64, 128], strides = [1, 1]} : vector<64x384xf32> to vector<64x128xf32>
    %38 = vector.extract_strided_slice %36 {offsets = [0, 128], sizes = [64, 128], strides = [1, 1]} : vector<64x384xf32> to vector<64x128xf32>
    %39 = vector.extract_strided_slice %36 {offsets = [0, 256], sizes = [64, 128], strides = [1, 1]} : vector<64x384xf32> to vector<64x128xf32>
    %cst_18 = arith.constant dense<0.000000e+00> : vector<64x64xf32>
    %40 = tpu.matmul %37, %38, %cst_18 {dimension_numbers = #tpu.dot_dimension_numbers<[1], [1], [0], [0], [0, 0, 1, 0], [], []>} : vector<64x128xf32>, vector<64x128xf32>, vector<64x64xf32> -> vector<64x64xf32>
    %cst_19 = arith.constant dense<0xFF800000> : vector<64xf32>
    %41 = vector.multi_reduction <maximumf>, %40, %cst_19 [1] : vector<64x64xf32> to vector<64xf32>
    %42 = vector.shape_cast %41 : vector<64xf32> to vector<64x1xf32>
    %43 = vector.broadcast %42 : vector<64x1xf32> to vector<64x64xf32>
    %44 = arith.subf %40, %43 : vector<64x64xf32>
    %45 = math.exp %44 : vector<64x64xf32>
    %cst_20 = arith.constant dense<0.000000e+00> : vector<64xf32>
    %46 = vector.multi_reduction <add>, %45, %cst_20 [1] : vector<64x64xf32> to vector<64xf32>
    %47 = vector.shape_cast %46 : vector<64xf32> to vector<64x1xf32>
    %48 = tpu.reciprocal %47 {approx = true} : vector<64x1xf32> -> vector<64x1xf32>
    %49 = vector.broadcast %48 : vector<64x1xf32> to vector<64x64xf32>
    %50 = arith.mulf %45, %49 : vector<64x64xf32>
    %51 = arith.truncf %50 : vector<64x64xf32> to vector<64x64xbf16>
    %52 = arith.truncf %39 : vector<64x128xf32> to vector<64x128xbf16>
    %cst_21 = arith.constant dense<0.000000e+00> : vector<64x128xf32>
    %53 = tpu.matmul %51, %52, %cst_21 {dimension_numbers = #tpu.dot_dimension_numbers<[1], [0], [0], [1], [0, 0, 1, 1], [], []>} : vector<64x64xbf16>, vector<64x128xbf16>, vector<64x128xf32> -> vector<64x128xf32>
    %54 = vector.broadcast %3 : f32 to vector<64x128xf32>
    %55 = arith.mulf %54, %53 : vector<64x128xf32>
    %56 = arith.addf %55, %33 : vector<64x128xf32>
    %c1_22 = arith.constant 1 : index
    %c0_23 = arith.constant 0 : index
    %c0_24 = arith.constant 0 : index
    %57 = vector.load %arg5[%c1_22, %c0_23, %c0_24] : memref<2x64x128xf32, #tpu.memory_space<vmem>>, vector<1x64x128xf32>
    %58 = vector.shape_cast %57 : vector<1x64x128xf32> to vector<64x128xf32>
    %59 = vector.shape_cast %56 : vector<64x128xf32> to vector<1x64x128xf32>
    tpu.vector_store %arg5[%c1_22, %c0_23, %c0_24], %59 {strides = array<i32>} : memref<2x64x128xf32, #tpu.memory_space<vmem>>, vector<1x64x128xf32>,
    return
  }
  func.func @transform_0(%arg0: i32) -> (i32, i32, i32) {
    %c0_i32 = arith.constant 0 : i32
    %c0_i32_0 = arith.constant 0 : i32
    %c0_i32_1 = arith.constant 0 : i32
    return %arg0, %c0_i32, %c0_i32_0 : i32, i32, i32
  }
  func.func @transform_1(%arg0: i32) -> (i32, i32) {
    %c0_i32 = arith.constant 0 : i32
    %c0_i32_0 = arith.constant 0 : i32
    %c0_i32_1 = arith.constant 0 : i32
    return %c0_i32, %c0_i32_0 : i32, i32
  }
  func.func @transform_2(%arg0: i32) -> (i32, i32) {
    %c0_i32 = arith.constant 0 : i32
    %c0_i32_0 = arith.constant 0 : i32
    %c0_i32_1 = arith.constant 0 : i32
    return %c0_i32, %c0_i32_0 : i32, i32
  }
  func.func @transform_3(%arg0: i32) -> (i32, i32) {
    %c0_i32 = arith.constant 0 : i32
    %c0_i32_0 = arith.constant 0 : i32
    %c0_i32_1 = arith.constant 0 : i32
    return %c0_i32, %c0_i32_0 : i32, i32
  }
  func.func @transform_4(%arg0: i32) -> (i32, i32, i32) {
    %c0_i32 = arith.constant 0 : i32
    %c0_i32_0 = arith.constant 0 : i32
    %c0_i32_1 = arith.constant 0 : i32
    return %arg0, %c0_i32, %c0_i32_0 : i32, i32, i32
  }
}

</mosaic_0001>

<llo_original>
// kernel: tpu_custom_call.1
$region0: #{tpu_custom_call.1}
  #allocation0 [shape = 'u32[]', space=smem, size = 0x4, offset = 0x4, fixed_abs, tag = 'smem constant byte address 0x4 - core index']
  #allocation1 [shape = 'u32[144,128]{1,0:T(1,128)}', space=vmem, size = 0x12000, scoped, tag = 'internal scratch']
  #allocation2 [shape = 'f32[1,1]{1,0:T(1,128)S(1)}', space=vmem, size = 0x200, scoped, tag = 'scoped memory for tpu_custom_call.1']
  %s0 = inlined_call_operand.hbm [shape: f32[2,64,128], index: 0, kind: input, shape index: {}]
  %s1 = inlined_call_operand.hbm [shape: f32[128,384], index: 1, kind: input, shape index: {}]
  %s2 = inlined_call_operand.vmem [shape: f32[1,384], index: 2, kind: input, shape index: {}]
  %s3 = inlined_call_operand.<no memory space> [shape: f32[1,1], index: 3, kind: input, shape index: {}]
  %s4 = inlined_call_operand.hbm [shape: f32[2,64,128], index: 4, kind: output, shape index: {}]
  %s5 = sld [smem:[#allocation0]]
  $region34: #{tpu_custom_call.1} parent=0
    _
  %s7 = ssub.s32 1, %s5
  %s8 = scalar_select 0, %s7, %s5
  %v9 = vstv %s3
  %10 = vst [vmem:[#allocation2] sm:$0x1] %v9
  $region1: #{tpu_custom_call.1} parent=0
    #allocation3 [shape = 'u8[65536]{0}', space=vmem, size = 0x10000, scoped, tag = 'input window, operand 0, single buffered']
    #allocation4 [shape = 's32[1]{0}', space=sflag, size = 0x4, scoped, tag = 'scoped memory for tpu_custom_call.1']
    #allocation5 [shape = 's32[1]{0}', space=sflag, size = 0x4, scoped, tag = 'scoped memory for tpu_custom_call.1']
    #allocation6 [shape = 'u8[196608]{0}', space=vmem, size = 0x30000, scoped, tag = 'input window, operand 1, single buffered']
    #allocation7 [shape = 's32[1]{0}', space=sflag, size = 0x4, scoped, tag = 'scoped memory for tpu_custom_call.1']
    #allocation8 [shape = 'u8[65536]{0}', space=vmem, size = 0x10000, scoped, tag = 'output window, operand 0, single buffered']
    %11 = vsyncpa [#allocation4], 0
    %12 = vsyncpa [#allocation7], 0
    %13 = vsyncpa [#allocation5], 0
    // Predicated region
    $region2: #{tpu_custom_call.1} parent=1 // pred_check
      _
    $region3: #{tpu_custom_call.1} parent=1 // pred_check_branch
      %15 = sbr.rel (0) target = $region5
    $region4: #{tpu_custom_call.1} parent=1 // pred_region
      %s17 = ssub.s32 2048, 2048
      %18 = vsyncadd [#allocation4], %s17
      %s19 = sshll.u32 [#allocation3], 4
      %s20 = int_to_ptr.vmem [resolvable:$true] %s19
      %25 = dma.hbm_to_vmem [thread:$0]  %s0, 2048, %s20, [#allocation4], 128, 128, 8
    $region5: #{tpu_custom_call.1} parent=1 // pred_fallthru
      _
    // Predicated region
    $region6: #{tpu_custom_call.1} parent=1 // pred_check
      _
    $region7: #{tpu_custom_call.1} parent=1 // pred_check_branch
      %27 = sbr.rel (0) target = $region9
    $region8: #{tpu_custom_call.1} parent=1 // pred_region
      %s29 = ssub.s32 6144, 6144
      %30 = vsyncadd [#allocation7], %s29
      %s31 = sshll.u32 [#allocation6], 4
      %s32 = int_to_ptr.vmem [resolvable:$true] %s31
      %37 = dma.hbm_to_vmem [thread:$0]  %s1, 6144, %s32, [#allocation7], 384, 384, 24
    $region9: #{tpu_custom_call.1} parent=1 // pred_fallthru
      _
    // Predicated region
    $region10: #{tpu_custom_call.1} parent=1 // pred_check
      _
    $region11: #{tpu_custom_call.1} parent=1 // pred_check_branch
      %39 = sbr.rel (0) target = $region13
    $region12: #{tpu_custom_call.1} parent=1 // pred_region
      _
    $region13: #{tpu_custom_call.1} parent=1 // pred_fallthru
      _
    // Predicated region
    $region14: #{tpu_custom_call.1} parent=1 // pred_check
      _
    $region15: #{tpu_custom_call.1} parent=1 // pred_check_branch
      %41 = sbr.rel (0) target = $region17
    $region16: #{tpu_custom_call.1} parent=1 // pred_region
      _
    $region17: #{tpu_custom_call.1} parent=1 // pred_fallthru
      _
    // Predicated region
    $region18: #{tpu_custom_call.1} parent=1 // pred_check
      _
    $region19: #{tpu_custom_call.1} parent=1 // pred_check_branch
      %43 = sbr.rel (0) target = $region21
    $region20: #{tpu_custom_call.1} parent=1 // pred_region
      %44 = dma.done [#allocation4], 2048
    $region21: #{tpu_custom_call.1} parent=1 // pred_fallthru
      _
    // Predicated region
    $region22: #{tpu_custom_call.1} parent=1 // pred_check
      _
    $region23: #{tpu_custom_call.1} parent=1 // pred_check_branch
      %46 = sbr.rel (0) target = $region25
    $region24: #{tpu_custom_call.1} parent=1 // pred_region
      %47 = dma.done [#allocation7], 6144
    $region25: #{tpu_custom_call.1} parent=1 // pred_fallthru
      _
    %v49 = vld [vmem:[#allocation6] sm:$0xff]
    %v50 = vld [vmem:[#allocation6 + $0x8] sm:$0xff]
    %v51 = vld [vmem:[#allocation6 + $0x10] sm:$0xff]
    %v52 = vld [vmem:[#allocation6 + $0x18] sm:$0xff]
    %v53 = vld [vmem:[#allocation6 + $0x20] sm:$0xff]
    %v54 = vld [vmem:[#allocation6 + $0x28] sm:$0xff]
    %v55 = vld [vmem:[#allocation6 + $0x30] sm:$0xff]
    %v56 = vld [vmem:[#allocation6 + $0x38] sm:$0xff]
    %v57 = vld [vmem:[#allocation6 + $0x40] sm:$0xff]
    %v58 = vld [vmem:[#allocation6 + $0x48] sm:$0xff]
    %v59 = vld [vmem:[#allocation6 + $0x50] sm:$0xff]
    %v60 = vld [vmem:[#allocation6 + $0x58] sm:$0xff]
    %v61 = vld [vmem:[#allocation6 + $0x60] sm:$0xff]
    %v62 = vld [vmem:[#allocation6 + $0x68] sm:$0xff]
    %v63 = vld [vmem:[#allocation6 + $0x70] sm:$0xff]
    %v64 = vld [vmem:[#allocation6 + $0x78] sm:$0xff]
    %v65 = vld [vmem:[#allocation6 + $0x80] sm:$0xff]
    %v66 = vld [vmem:[#allocation6 + $0x88] sm:$0xff]
    %v67 = vld [vmem:[#allocation6 + $0x90] sm:$0xff]
    %v68 = vld [vmem:[#allocation6 + $0x98] sm:$0xff]
    %v69 = vld [vmem:[#allocation6 + $0xa0] sm:$0xff]
    %v70 = vld [vmem:[#allocation6 + $0xa8] sm:$0xff]
    %v71 = vld [vmem:[#allocation6 + $0xb0] sm:$0xff]
    %v72 = vld [vmem:[#allocation6 + $0xb8] sm:$0xff]
    %v73 = vld [vmem:[#allocation6 + $0xc0] sm:$0xff]
    %v74 = vld [vmem:[#allocation6 + $0xc8] sm:$0xff]
    %v75 = vld [vmem:[#allocation6 + $0xd0] sm:$0xff]
    %v76 = vld [vmem:[#allocation6 + $0xd8] sm:$0xff]
    %v77 = vld [vmem:[#allocation6 + $0xe0] sm:$0xff]
    %v78 = vld [vmem:[#allocation6 + $0xe8] sm:$0xff]
    %v79 = vld [vmem:[#allocation6 + $0xf0] sm:$0xff]
    %v80 = vld [vmem:[#allocation6 + $0xf8] sm:$0xff]
    %v81 = vld [vmem:[#allocation6 + $0x100] sm:$0xff]
    %v82 = vld [vmem:[#allocation6 + $0x108] sm:$0xff]
    %v83 = vld [vmem:[#allocation6 + $0x110] sm:$0xff]
    %v84 = vld [vmem:[#allocation6 + $0x118] sm:$0xff]
    %v85 = vld [vmem:[#allocation6 + $0x120] sm:$0xff]
    %v86 = vld [vmem:[#allocation6 + $0x128] sm:$0xff]
    %v87 = vld [vmem:[#allocation6 + $0x130] sm:$0xff]
    %v88 = vld [vmem:[#allocation6 + $0x138] sm:$0xff]
    %v89 = vld [vmem:[#allocation6 + $0x140] sm:$0xff]
    %v90 = vld [vmem:[#allocation6 + $0x148] sm:$0xff]
    %v91 = vld [vmem:[#allocation6 + $0x150] sm:$0xff]
    %v92 = vld [vmem:[#allocation6 + $0x158] sm:$0xff]
    %v93 = vld [vmem:[#allocation6 + $0x160] sm:$0xff]
    %v94 = vld [vmem:[#allocation6 + $0x168] sm:$0xff]
    %v95 = vld [vmem:[#allocation6 + $0x170] sm:$0xff]
    %v96 = vld [vmem:[#allocation6 + $0x178] sm:$0xff]
    %v97 = vld [vmem:[%s2] sm:$0x7]
    %v98 = vld [vmem:[#allocation2] sm:$0x1]
    %s99 = vtos %v98
    %v100 = vld [vmem:[#allocation3] sm:$0xff]
    %v101 = vld [vmem:[#allocation3 + $0x8] sm:$0xff]
    %v102 = vld [vmem:[#allocation3 + $0x10] sm:$0xff]
    %v103 = vld [vmem:[#allocation3 + $0x18] sm:$0xff]
    %v104 = vld [vmem:[#allocation3 + $0x20] sm:$0xff]
    %v105 = vld [vmem:[#allocation3 + $0x28] sm:$0xff]
    %v106 = vld [vmem:[#allocation3 + $0x30] sm:$0xff]
    %v107 = vld [vmem:[#allocation3 + $0x38] sm:$0xff]
    %v109 = vlaneseq
    %v110 = vshrl.u32 %v109, 7
    %v111 = vsub.s32 0, %v110
    %v112 = vrot.slane %v97, %v111
    %v113 = vlaneseq
    %v114 = vshrl.u32 %v113, 7
    %v115 = vsub.s32 1, %v114
    %v116 = vrot.slane %v97, %v115
    %v117 = vlaneseq
    %v118 = vshrl.u32 %v117, 7
    %v119 = vsub.s32 2, %v118
    %v120 = vrot.slane %v97, %v119
    %124 = vmatprep.subr.mxu0 %v50
    %125 = vmatpush1.msra.mxu0 %v49
    %126 = vmatprep.subr.mxu0 %v53
    %127 = vmatpush1.msra.mxu0 %v52
    %128 = vmatprep.subr.mxu0 %v56
    %129 = vmatpush1.msra.mxu0 %v55
    %130 = vmatprep.subr.mxu0 %v59
    %131 = vmatpush1.msra.mxu0 %v58
    %132 = vmatprep.subr.mxu0 %v62
    %133 = vmatpush1.msra.mxu0 %v61
    %134 = vmatprep.subr.mxu0 %v65
    %135 = vmatpush1.msra.mxu0 %v64
    %136 = vmatprep.subr.mxu0 %v68
    %137 = vmatpush1.msra.mxu0 %v67
    %138 = vmatprep.subr.mxu0 %v71
    %139 = vmatpush1.msra.mxu0 %v70
    %140 = vmatprep.subr.mxu0 %v74
    %141 = vmatpush1.msra.mxu0 %v73
    %142 = vmatprep.subr.mxu0 %v77
    %143 = vmatpush1.msra.mxu0 %v76
    %144 = vmatprep.subr.mxu0 %v80
    %145 = vmatpush1.msra.mxu0 %v79
    %146 = vmatprep.subr.mxu0 %v83
    %147 = vmatpush1.msra.mxu0 %v82
    %148 = vmatprep.subr.mxu0 %v86
    %149 = vmatpush1.msra.mxu0 %v85
    %150 = vmatprep.subr.mxu0 %v89
    %151 = vmatpush1.msra.mxu0 %v88
    %152 = vmatprep.subr.mxu0 %v92
    %153 = vmatpush1.msra.mxu0 %v91
    %154 = vmatprep.subr.mxu0 %v95
    %155 = vmatpush1.msra.mxu0 %v94
    %156 = vmatprep.subr.mxu0 0.0
    %157 = vmatpush1.msra.mxu0 0.0
    %158 = vmatprep.subr.mxu0 0.0
    %159 = vmatpush1.msra.mxu0 0.0
    %160 = vmatprep.subr.mxu0 0.0
    %161 = vmatpush1.msra.mxu0 0.0
    %162 = vmatprep.subr.mxu0 0.0
    %163 = vmatpush1.msra.mxu0 0.0
    %164 = vmatprep.subr.mxu0 0.0
    %165 = vmatpush1.msra.mxu0 0.0
    %166 = vmatprep.subr.mxu0 0.0
    %167 = vmatpush1.msra.mxu0 0.0
    %168 = vmatprep.subr.mxu0 0.0
    %169 = vmatpush1.msra.mxu0 0.0
    %170 = vmatprep.subr.mxu0 0.0
    %171 = vmatpush1.msra.mxu0 0.0
    %172 = vmatprep.subr.mxu0 0.0
    %173 = vmatpush1.msra.mxu0 0.0
    %174 = vmatprep.subr.mxu0 0.0
    %175 = vmatpush1.msra.mxu0 0.0
    %176 = vmatprep.subr.mxu0 0.0
    %177 = vmatpush1.msra.mxu0 0.0
    %178 = vmatprep.subr.mxu0 0.0
    %179 = vmatpush1.msra.mxu0 0.0
    %180 = vmatprep.subr.mxu0 0.0
    %181 = vmatpush1.msra.mxu0 0.0
    %182 = vmatprep.subr.mxu0 0.0
    %183 = vmatpush1.msra.mxu0 0.0
    %184 = vmatprep.subr.mxu0 0.0
    %185 = vmatpush1.msra.mxu0 0.0
    %186 = vmatprep.subr.mxu0 0.0
    %187 = vmatpush1.msra.mxu0 0.0
    %188 = vmatprep.mubr.f32.mxu0 0.0
    %189 = vmatmul.mubr.f32.gmra.mrb[0].mxu0 %v100
    %v190 = vpop.f32.mrb[0].mxu0
    %v191 = vadd.f32 %v112, %v190
    %v192 = vpop.f32.mrb[0].mxu0
    %v193 = vadd.f32 %v116, %v192
    %194 = vmatprep.mubr.f32.mxu0 0.0
    %195 = vmatmul.mubr.f32.gmra.mrb[0].mxu0 %v101
    %v196 = vpop.f32.mrb[0].mxu0
    %v197 = vadd.f32 %v112, %v196
    %v198 = vpop.f32.mrb[0].mxu0
    %v199 = vadd.f32 %v116, %v198
    %200 = vmatprep.mubr.f32.mxu0 0.0
    %201 = vmatmul.mubr.f32.gmra.mrb[0].mxu0 %v102
    %v202 = vpop.f32.mrb[0].mxu0
    %v203 = vadd.f32 %v112, %v202
    %v204 = vpop.f32.mrb[0].mxu0
    %v205 = vadd.f32 %v116, %v204
    %206 = vmatprep.mubr.f32.mxu0 0.0
    %207 = vmatmul.mubr.f32.gmra.mrb[0].mxu0 %v103
    %v208 = vpop.f32.mrb[0].mxu0
    %v209 = vadd.f32 %v112, %v208
    %v210 = vpop.f32.mrb[0].mxu0
    %v211 = vadd.f32 %v116, %v210
    %212 = vmatprep.mubr.f32.mxu0 0.0
    %213 = vmatmul.mubr.f32.gmra.mrb[0].mxu0 %v104
    %v214 = vpop.f32.mrb[0].mxu0
    %v215 = vadd.f32 %v112, %v214
    %v216 = vpop.f32.mrb[0].mxu0
    %v217 = vadd.f32 %v116, %v216
    %218 = vmatprep.mubr.f32.mxu0 0.0
    %219 = vmatmul.mubr.f32.gmra.mrb[0].mxu0 %v105
    %v220 = vpop.f32.mrb[0].mxu0
    %v221 = vadd.f32 %v112, %v220
    %v222 = vpop.f32.mrb[0].mxu0
    %v223 = vadd.f32 %v116, %v222
    %224 = vmatprep.mubr.f32.mxu0 0.0
    %225 = vmatmul.mubr.f32.gmra.mrb[0].mxu0 %v106
    %v226 = vpop.f32.mrb[0].mxu0
    %v227 = vadd.f32 %v112, %v226
    %v228 = vpop.f32.mrb[0].mxu0
    %v229 = vadd.f32 %v116, %v228
    %230 = vmatprep.mubr.f32.mxu0 0.0
    %231 = vmatmul.mubr.f32.gmra.mrb[0].mxu0 %v107
    %v232 = vpop.f32.mrb[0].mxu0
    %v233 = vadd.f32 %v112, %v232
    %v234 = vpop.f32.mrb[0].mxu0
    %v235 = vadd.f32 %v116, %v234
    %236 = vdwg.mxu0
    %237 = vmatprep.subr.mxu0 0.0
    %238 = vmatpush1.msra.mxu0 %v51
    %239 = vmatprep.subr.mxu0 0.0
    %240 = vmatpush1.msra.mxu0 %v54
    %241 = vmatprep.subr.mxu0 0.0
    %242 = vmatpush1.msra.mxu0 %v57
    %243 = vmatprep.subr.mxu0 0.0
    %244 = vmatpush1.msra.mxu0 %v60
    %245 = vmatprep.subr.mxu0 0.0
    %246 = vmatpush1.msra.mxu0 %v63
    %247 = vmatprep.subr.mxu0 0.0
    %248 = vmatpush1.msra.mxu0 %v66
    %249 = vmatprep.subr.mxu0 0.0
    %250 = vmatpush1.msra.mxu0 %v69
    %251 = vmatprep.subr.mxu0 0.0
    %252 = vmatpush1.msra.mxu0 %v72
    %253 = vmatprep.subr.mxu0 0.0
    %254 = vmatpush1.msra.mxu0 %v75
    %255 = vmatprep.subr.mxu0 0.0
    %256 = vmatpush1.msra.mxu0 %v78
    %257 = vmatprep.subr.mxu0 0.0
    %258 = vmatpush1.msra.mxu0 %v81
    %259 = vmatprep.subr.mxu0 0.0
    %260 = vmatpush1.msra.mxu0 %v84
    %261 = vmatprep.subr.mxu0 0.0
    %262 = vmatpush1.msra.mxu0 %v87
    %263 = vmatprep.subr.mxu0 0.0
    %264 = vmatpush1.msra.mxu0 %v90
    %265 = vmatprep.subr.mxu0 0.0
    %266 = vmatpush1.msra.mxu0 %v93
    %267 = vmatprep.subr.mxu0 0.0
    %268 = vmatpush1.msra.mxu0 %v96
    %269 = vmatprep.subr.mxu0 0.0
    %270 = vmatpush1.msra.mxu0 0.0
    %271 = vmatprep.subr.mxu0 0.0
    %272 = vmatpush1.msra.mxu0 0.0
    %273 = vmatprep.subr.mxu0 0.0
    %274 = vmatpush1.msra.mxu0 0.0
    %275 = vmatprep.subr.mxu0 0.0
    %276 = vmatpush1.msra.mxu0 0.0
    %277 = vmatprep.subr.mxu0 0.0
    %278 = vmatpush1.msra.mxu0 0.0
    %279 = vmatprep.subr.mxu0 0.0
    %280 = vmatpush1.msra.mxu0 0.0
    %281 = vmatprep.subr.mxu0 0.0
    %282 = vmatpush1.msra.mxu0 0.0
    %283 = vmatprep.subr.mxu0 0.0
    %284 = vmatpush1.msra.mxu0 0.0
    %285 = vmatprep.subr.mxu0 0.0
    %286 = vmatpush1.msra.mxu0 0.0
    %287 = vmatprep.subr.mxu0 0.0
    %288 = vmatpush1.msra.mxu0 0.0
    %289 = vmatprep.subr.mxu0 0.0
    %290 = vmatpush1.msra.mxu0 0.0
    %291 = vmatprep.subr.mxu0 0.0
    %292 = vmatpush1.msra.mxu0 0.0
    %293 = vmatprep.subr.mxu0 0.0
    %294 = vmatpush1.msra.mxu0 0.0
    %295 = vmatprep.subr.mxu0 0.0
    %296 = vmatpush1.msra.mxu0 0.0
    %297 = vmatprep.subr.mxu0 0.0
    %298 = vmatpush1.msra.mxu0 0.0
    %299 = vmatprep.subr.mxu0 0.0
    %300 = vmatpush1.msra.mxu0 0.0
    %301 = vmatprep.mubr.f32.mxu0 0.0
    %302 = vmatmul.mubr.f32.gmra.mrb[0].mxu0 %v100
    %v303 = vpop.f32.mrb[0].mxu0
    %v304 = vadd.f32 %v120, %v303
    %v305 = vpop.f32.mrb[0].mxu0
    %306 = vmatprep.mubr.f32.mxu0 0.0
    %307 = vmatmul.mubr.f32.gmra.mrb[0].mxu0 %v101
    %v308 = vpop.f32.mrb[0].mxu0
    %v309 = vadd.f32 %v120, %v308
    %v310 = vpop.f32.mrb[0].mxu0
    %311 = vmatprep.mubr.f32.mxu0 0.0
    %312 = vmatmul.mubr.f32.gmra.mrb[0].mxu0 %v102
    %v313 = vpop.f32.mrb[0].mxu0
    %v314 = vadd.f32 %v120, %v313
    %v315 = vpop.f32.mrb[0].mxu0
    %316 = vmatprep.mubr.f32.mxu0 0.0
    %317 = vmatmul.mubr.f32.gmra.mrb[0].mxu0 %v103
    %v318 = vpop.f32.mrb[0].mxu0
    %v319 = vadd.f32 %v120, %v318
    %v320 = vpop.f32.mrb[0].mxu0
    %321 = vmatprep.mubr.f32.mxu0 0.0
    %322 = vmatmul.mubr.f32.gmra.mrb[0].mxu0 %v104
    %v323 = vpop.f32.mrb[0].mxu0
    %v324 = vadd.f32 %v120, %v323
    %v325 = vpop.f32.mrb[0].mxu0
    %326 = vmatprep.mubr.f32.mxu0 0.0
    %327 = vmatmul.mubr.f32.gmra.mrb[0].mxu0 %v105
    %v328 = vpop.f32.mrb[0].mxu0
    %v329 = vadd.f32 %v120, %v328
    %v330 = vpop.f32.mrb[0].mxu0
    %331 = vmatprep.mubr.f32.mxu0 0.0
    %332 = vmatmul.mubr.f32.gmra.mrb[0].mxu0 %v106
    %v333 = vpop.f32.mrb[0].mxu0
    %v334 = vadd.f32 %v120, %v333
    %v335 = vpop.f32.mrb[0].mxu0
    %336 = vmatprep.mubr.f32.mxu0 0.0
    %337 = vmatmul.mubr.f32.gmra.mrb[0].mxu0 %v107
    %v338 = vpop.f32.mrb[0].mxu0
    %v339 = vadd.f32 %v120, %v338
    %v340 = vpop.f32.mrb[0].mxu0
    %341 = vdwg.mxu0
    %342 = vmatprep.subr.mxu0 0.0
    %343 = vmatpush1.xpose.msra.mxu0 %v193
    %344 = vmatprep.subr.mxu0 0.0
    %345 = vmatpush1.xpose.msra.mxu0 %v199
    %346 = vmatprep.subr.mxu0 0.0
    %347 = vmatpush1.xpose.msra.mxu0 %v205
    %348 = vmatprep.subr.mxu0 0.0
    %349 = vmatpush1.xpose.msra.mxu0 %v211
    %350 = vmatprep.subr.mxu0 0.0
    %351 = vmatpush1.xpose.msra.mxu0 %v217
    %352 = vmatprep.subr.mxu0 0.0
    %353 = vmatpush1.xpose.msra.mxu0 %v223
    %354 = vmatprep.subr.mxu0 0.0
    %355 = vmatpush1.xpose.msra.mxu0 %v229
    %356 = vmatprep.subr.mxu0 0.0
    %357 = vmatpush1.xpose.msra.mxu0 %v235
    %358 = vmatprep.subr.mxu0 0.0
    %359 = vmatpush1.xpose.msra.mxu0 0.0
    %360 = vmatprep.subr.mxu0 0.0
    %361 = vmatpush1.xpose.msra.mxu0 0.0
    %362 = vmatprep.subr.mxu0 0.0
    %363 = vmatpush1.xpose.msra.mxu0 0.0
    %364 = vmatprep.subr.mxu0 0.0
    %365 = vmatpush1.xpose.msra.mxu0 0.0
    %366 = vmatprep.subr.mxu0 0.0
    %367 = vmatpush1.xpose.msra.mxu0 0.0
    %368 = vmatprep.subr.mxu0 0.0
    %369 = vmatpush1.xpose.msra.mxu0 0.0
    %370 = vmatprep.subr.mxu0 0.0
    %371 = vmatpush1.xpose.msra.mxu0 0.0
    %372 = vmatprep.subr.mxu0 0.0
    %373 = vmatpush1.xpose.msra.mxu0 0.0
    %374 = vmatprep.subr.mxu0 0.0
    %375 = vmatpush1.xpose.msra.mxu0 0.0
    %376 = vmatprep.subr.mxu0 0.0
    %377 = vmatpush1.xpose.msra.mxu0 0.0
    %378 = vmatprep.subr.mxu0 0.0
    %379 = vmatpush1.xpose.msra.mxu0 0.0
    %380 = vmatprep.subr.mxu0 0.0
    %381 = vmatpush1.xpose.msra.mxu0 0.0
    %382 = vmatprep.subr.mxu0 0.0
    %383 = vmatpush1.xpose.msra.mxu0 0.0
    %384 = vmatprep.subr.mxu0 0.0
    %385 = vmatpush1.xpose.msra.mxu0 0.0
    %386 = vmatprep.subr.mxu0 0.0
    %387 = vmatpush1.xpose.msra.mxu0 0.0
    %388 = vmatprep.subr.mxu0 0.0
    %389 = vmatpush1.xpose.msra.mxu0 0.0
    %390 = vmatprep.subr.mxu0 0.0
    %391 = vmatpush1.xpose.msra.mxu0 0.0
    %392 = vmatprep.subr.mxu0 0.0
    %393 = vmatpush1.xpose.msra.mxu0 0.0
    %394 = vmatprep.subr.mxu0 0.0
    %395 = vmatpush1.xpose.msra.mxu0 0.0
    %396 = vmatprep.subr.mxu0 0.0
    %397 = vmatpush1.xpose.msra.mxu0 0.0
    %398 = vmatprep.subr.mxu0 0.0
    %399 = vmatpush1.xpose.msra.mxu0 0.0
    %400 = vmatprep.subr.mxu0 0.0
    %401 = vmatpush1.xpose.msra.mxu0 0.0
    %402 = vmatprep.subr.mxu0 0.0
    %403 = vmatpush1.xpose.msra.mxu0 0.0
    %404 = vmatprep.subr.mxu0 0.0
    %405 = vmatpush1.xpose.msra.mxu0 0.0
    %406 = vmatprep.mubr.f32.mxu0 0.0
    %407 = vmatmul.mubr.f32.gmra.mrb[0].mxu0 %v191
    %v408 = vpop.f32.mrb[0].mxu0
    %v409 = vadd.f32 0.0, %v408
    %v410 = vpop.f32.mrb[0].mxu0
    %411 = vmatprep.mubr.f32.mxu0 0.0
    %412 = vmatmul.mubr.f32.gmra.mrb[0].mxu0 %v197
    %v413 = vpop.f32.mrb[0].mxu0
    %v414 = vadd.f32 0.0, %v413
    %v415 = vpop.f32.mrb[0].mxu0
    %416 = vmatprep.mubr.f32.mxu0 0.0
    %417 = vmatmul.mubr.f32.gmra.mrb[0].mxu0 %v203
    %v418 = vpop.f32.mrb[0].mxu0
    %v419 = vadd.f32 0.0, %v418
    %v420 = vpop.f32.mrb[0].mxu0
    %421 = vmatprep.mubr.f32.mxu0 0.0
    %422 = vmatmul.mubr.f32.gmra.mrb[0].mxu0 %v209
    %v423 = vpop.f32.mrb[0].mxu0
    %v424 = vadd.f32 0.0, %v423
    %v425 = vpop.f32.mrb[0].mxu0
    %426 = vmatprep.mubr.f32.mxu0 0.0
    %427 = vmatmul.mubr.f32.gmra.mrb[0].mxu0 %v215
    %v428 = vpop.f32.mrb[0].mxu0
    %v429 = vadd.f32 0.0, %v428
    %v430 = vpop.f32.mrb[0].mxu0
    %431 = vmatprep.mubr.f32.mxu0 0.0
    %432 = vmatmul.mubr.f32.gmra.mrb[0].mxu0 %v221
    %v433 = vpop.f32.mrb[0].mxu0
    %v434 = vadd.f32 0.0, %v433
    %v435 = vpop.f32.mrb[0].mxu0
    %436 = vmatprep.mubr.f32.mxu0 0.0
    %437 = vmatmul.mubr.f32.gmra.mrb[0].mxu0 %v227
    %v438 = vpop.f32.mrb[0].mxu0
    %v439 = vadd.f32 0.0, %v438
    %v440 = vpop.f32.mrb[0].mxu0
    %441 = vmatprep.mubr.f32.mxu0 0.0
    %442 = vmatmul.mubr.f32.gmra.mrb[0].mxu0 %v233
    %v443 = vpop.f32.mrb[0].mxu0
    %v444 = vadd.f32 0.0, %v443
    %v445 = vpop.f32.mrb[0].mxu0
    %446 = vdwg.mxu0
    %vm447 = vcmask 523264
    %v448 = vsel %vm447, %v409, -inf
    %449 = vmax.xlane.f32.xlu0 %v448
    %v450 = vpop.xlane.xlu0 %449
    %v451 = vsel %vm447, %v414, -inf
    %452 = vmax.xlane.f32.xlu0 %v451
    %v453 = vpop.xlane.xlu0 %452
    %v454 = vsel %vm447, %v419, -inf
    %455 = vmax.xlane.f32.xlu0 %v454
    %v456 = vpop.xlane.xlu0 %455
    %v457 = vsel %vm447, %v424, -inf
    %458 = vmax.xlane.f32.xlu0 %v457
    %v459 = vpop.xlane.xlu0 %458
    %v460 = vsel %vm447, %v429, -inf
    %461 = vmax.xlane.f32.xlu0 %v460
    %v462 = vpop.xlane.xlu0 %461
    %v463 = vsel %vm447, %v434, -inf
    %464 = vmax.xlane.f32.xlu0 %v463
    %v465 = vpop.xlane.xlu0 %464
    %v466 = vsel %vm447, %v439, -inf
    %467 = vmax.xlane.f32.xlu0 %v466
    %v468 = vpop.xlane.xlu0 %467
    %v469 = vsel %vm447, %v444, -inf
    %470 = vmax.xlane.f32.xlu0 %v469
    %v471 = vpop.xlane.xlu0 %470
    %v472 = vsub.f32 %v409, %v450
    %v473 = vsub.f32 %v414, %v453
    %v474 = vsub.f32 %v419, %v456
    %v475 = vsub.f32 %v424, %v459
    %v476 = vsub.f32 %v429, %v462
    %v477 = vsub.f32 %v434, %v465
    %v478 = vsub.f32 %v439, %v468
    %v479 = vsub.f32 %v444, %v471
    %v480 = vmul.f32 %v472, 1.442695
    %v481 = vpow.pop %v480
    %v482 = vmul.f32 %v473, 1.442695
    %v483 = vpow.pop %v482
    %v484 = vmul.f32 %v474, 1.442695
    %v485 = vpow.pop %v484
    %v486 = vmul.f32 %v475, 1.442695
    %v487 = vpow.pop %v486
    %v488 = vmul.f32 %v476, 1.442695
    %v489 = vpow.pop %v488
    %v490 = vmul.f32 %v477, 1.442695
    %v491 = vpow.pop %v490
    %v492 = vmul.f32 %v478, 1.442695
    %v493 = vpow.pop %v492
    %v494 = vmul.f32 %v479, 1.442695
    %v495 = vpow.pop %v494
    %v496 = vsel %vm447, %v481, 0.0
    %497 = vadd.xlane.f32.xlu0 %v496
    %v498 = vpop.xlane.xlu0 %497
    %v499 = vsel %vm447, %v483, 0.0
    %500 = vadd.xlane.f32.xlu0 %v499
    %v501 = vpop.xlane.xlu0 %500
    %v502 = vsel %vm447, %v485, 0.0
    %503 = vadd.xlane.f32.xlu0 %v502
    %v504 = vpop.xlane.xlu0 %503
    %v505 = vsel %vm447, %v487, 0.0
    %506 = vadd.xlane.f32.xlu0 %v505
    %v507 = vpop.xlane.xlu0 %506
    %v508 = vsel %vm447, %v489, 0.0
    %509 = vadd.xlane.f32.xlu0 %v508
    %v510 = vpop.xlane.xlu0 %509
    %v511 = vsel %vm447, %v491, 0.0
    %512 = vadd.xlane.f32.xlu0 %v511
    %v513 = vpop.xlane.xlu0 %512
    %v514 = vsel %vm447, %v493, 0.0
    %515 = vadd.xlane.f32.xlu0 %v514
    %v516 = vpop.xlane.xlu0 %515
    %v517 = vsel %vm447, %v495, 0.0
    %518 = vadd.xlane.f32.xlu0 %v517
    %v519 = vpop.xlane.xlu0 %518
    %v520 = vrcp.pop %v498
    %v521 = vrcp.pop %v501
    %v522 = vrcp.pop %v504
    %v523 = vrcp.pop %v507
    %v524 = vrcp.pop %v510
    %v525 = vrcp.pop %v513
    %v526 = vrcp.pop %v516
    %v527 = vrcp.pop %v519
    %v528 = vmul.f32 %v481, %v520
    %v529 = vmul.f32 %v483, %v521
    %v530 = vmul.f32 %v485, %v522
    %v531 = vmul.f32 %v487, %v523
    %v532 = vmul.f32 %v489, %v524
    %v533 = vmul.f32 %v491, %v525
    %v534 = vmul.f32 %v493, %v526
    %v535 = vmul.f32 %v495, %v527
    %v536 = vpack.c.bf16 %v529, %v528
    %v537 = vpack.c.bf16 %v531, %v530
    %v538 = vpack.c.bf16 %v533, %v532
    %v539 = vpack.c.bf16 %v535, %v534
    %v540 = vpack.c.bf16 %v309, %v304
    %v541 = vpack.c.bf16 %v319, %v314
    %v542 = vpack.c.bf16 %v329, %v324
    %v543 = vpack.c.bf16 %v339, %v334
    %v545 = vsel %vm447, %v536, 0
    %v548 = vsel %vm447, %v537, 0
    %v551 = vsel %vm447, %v538, 0
    %v554 = vsel %vm447, %v539, 0
    %556 = vmatprep.subr.bf16.mxu0 0
    %557 = vmatpush1.bf16.msra.mxu0 %v540
    %558 = vmatprep.subr.bf16.mxu0 0
    %559 = vmatpush1.bf16.msra.mxu0 %v541
    %560 = vmatprep.subr.bf16.mxu0 0
    %561 = vmatpush1.bf16.msra.mxu0 %v542
    %562 = vmatprep.subr.bf16.mxu0 0
    %563 = vmatpush1.bf16.msra.mxu0 %v543
    %564 = vmatprep.subr.bf16.mxu0 0
    %565 = vmatpush1.bf16.msra.mxu0 0
    %566 = vmatprep.subr.bf16.mxu0 0
    %567 = vmatpush1.bf16.msra.mxu0 0
    %568 = vmatprep.subr.bf16.mxu0 0
    %569 = vmatpush1.bf16.msra.mxu0 0
    %570 = vmatprep.subr.bf16.mxu0 0
    %571 = vmatpush1.bf16.msra.mxu0 0
    %572 = vmatprep.subr.bf16.mxu0 0
    %573 = vmatpush1.bf16.msra.mxu0 0
    %574 = vmatprep.subr.bf16.mxu0 0
    %575 = vmatpush1.bf16.msra.mxu0 0
    %576 = vmatprep.subr.bf16.mxu0 0
    %577 = vmatpush1.bf16.msra.mxu0 0
    %578 = vmatprep.subr.bf16.mxu0 0
    %579 = vmatpush1.bf16.msra.mxu0 0
    %580 = vmatprep.subr.bf16.mxu0 0
    %581 = vmatpush1.bf16.msra.mxu0 0
    %582 = vmatprep.subr.bf16.mxu0 0
    %583 = vmatpush1.bf16.msra.mxu0 0
    %584 = vmatprep.subr.bf16.mxu0 0
    %585 = vmatpush1.bf16.msra.mxu0 0
    %586 = vmatprep.subr.bf16.mxu0 0
    %587 = vmatpush1.bf16.msra.mxu0 0
    %588 = vmatprep.mubr.bf16.mxu0 0
    %589 = vmatmul.mubr.bf16.gmra.mrb[0].mxu0 %v545
    %v590 = vpop.f32.mrb[0].mxu0
    %v591 = vadd.f32 0.0, %v590
    %v592 = vpop.f32.mrb[0].mxu0
    %v593 = vpop.f32.mrb[0].mxu0
    %v594 = vadd.f32 0.0, %v593
    %v595 = vpop.f32.mrb[0].mxu0
    %596 = vmatprep.mubr.bf16.mxu0 0
    %597 = vmatmul.mubr.bf16.gmra.mrb[0].mxu0 %v548
    %v598 = vpop.f32.mrb[0].mxu0
    %v599 = vadd.f32 0.0, %v598
    %v600 = vpop.f32.mrb[0].mxu0
    %v601 = vpop.f32.mrb[0].mxu0
    %v602 = vadd.f32 0.0, %v601
    %v603 = vpop.f32.mrb[0].mxu0
    %604 = vmatprep.mubr.bf16.mxu0 0
    %605 = vmatmul.mubr.bf16.gmra.mrb[0].mxu0 %v551
    %v606 = vpop.f32.mrb[0].mxu0
    %v607 = vadd.f32 0.0, %v606
    %v608 = vpop.f32.mrb[0].mxu0
    %v609 = vpop.f32.mrb[0].mxu0
    %v610 = vadd.f32 0.0, %v609
    %v611 = vpop.f32.mrb[0].mxu0
    %612 = vmatprep.mubr.bf16.mxu0 0
    %613 = vmatmul.mubr.bf16.gmra.mrb[0].mxu0 %v554
    %v614 = vpop.f32.mrb[0].mxu0
    %v615 = vadd.f32 0.0, %v614
    %v616 = vpop.f32.mrb[0].mxu0
    %v617 = vpop.f32.mrb[0].mxu0
    %v618 = vadd.f32 0.0, %v617
    %v619 = vpop.f32.mrb[0].mxu0
    %620 = vdwg.mxu0
    %v621 = vstv %s99
    %v622 = vmul.f32 %v621, %v591
    %v623 = vmul.f32 %v621, %v594
    %v624 = vmul.f32 %v621, %v599
    %v625 = vmul.f32 %v621, %v602
    %v626 = vmul.f32 %v621, %v607
    %v627 = vmul.f32 %v621, %v610
    %v628 = vmul.f32 %v621, %v615
    %v629 = vmul.f32 %v621, %v618
    %v630 = vadd.f32 %v622, %v100
    %v631 = vadd.f32 %v623, %v101
    %v632 = vadd.f32 %v624, %v102
    %v633 = vadd.f32 %v625, %v103
    %v634 = vadd.f32 %v626, %v104
    %v635 = vadd.f32 %v627, %v105
    %v636 = vadd.f32 %v628, %v106
    %v637 = vadd.f32 %v629, %v107
    %638 = vst [vmem:[#allocation8] sm:$0xff] %v630
    %639 = vst [vmem:[#allocation8 + $0x8] sm:$0xff] %v631
    %640 = vst [vmem:[#allocation8 + $0x10] sm:$0xff] %v632
    %641 = vst [vmem:[#allocation8 + $0x18] sm:$0xff] %v633
    %642 = vst [vmem:[#allocation8 + $0x20] sm:$0xff] %v634
    %643 = vst [vmem:[#allocation8 + $0x28] sm:$0xff] %v635
    %644 = vst [vmem:[#allocation8 + $0x30] sm:$0xff] %v636
    %645 = vst [vmem:[#allocation8 + $0x38] sm:$0xff] %v637
    %s646 = scalar_lea.vmem [#allocation3], 64
    %v647 = vld [vmem:[%s646] sm:$0xff]
    %v648 = vld [vmem:[%s646 + $0x8] sm:$0xff]
    %v649 = vld [vmem:[%s646 + $0x10] sm:$0xff]
    %v650 = vld [vmem:[%s646 + $0x18] sm:$0xff]
    %v651 = vld [vmem:[%s646 + $0x20] sm:$0xff]
    %v652 = vld [vmem:[%s646 + $0x28] sm:$0xff]
    %v653 = vld [vmem:[%s646 + $0x30] sm:$0xff]
    %v654 = vld [vmem:[%s646 + $0x38] sm:$0xff]
    %655 = vmatprep.subr.mxu0 %v50
    %656 = vmatpush1.msra.mxu0 %v49
    %657 = vmatprep.subr.mxu0 %v53
    %658 = vmatpush1.msra.mxu0 %v52
    %659 = vmatprep.subr.mxu0 %v56
    %660 = vmatpush1.msra.mxu0 %v55
    %661 = vmatprep.subr.mxu0 %v59
    %662 = vmatpush1.msra.mxu0 %v58
    %663 = vmatprep.subr.mxu0 %v62
    %664 = vmatpush1.msra.mxu0 %v61
    %665 = vmatprep.subr.mxu0 %v65
    %666 = vmatpush1.msra.mxu0 %v64
    %667 = vmatprep.subr.mxu0 %v68
    %668 = vmatpush1.msra.mxu0 %v67
    %669 = vmatprep.subr.mxu0 %v71
    %670 = vmatpush1.msra.mxu0 %v70
    %671 = vmatprep.subr.mxu0 %v74
    %672 = vmatpush1.msra.mxu0 %v73
    %673 = vmatprep.subr.mxu0 %v77
    %674 = vmatpush1.msra.mxu0 %v76
    %675 = vmatprep.subr.mxu0 %v80
    %676 = vmatpush1.msra.mxu0 %v79
    %677 = vmatprep.subr.mxu0 %v83
    %678 = vmatpush1.msra.mxu0 %v82
    %679 = vmatprep.subr.mxu0 %v86
    %680 = vmatpush1.msra.mxu0 %v85
    %681 = vmatprep.subr.mxu0 %v89
    %682 = vmatpush1.msra.mxu0 %v88
    %683 = vmatprep.subr.mxu0 %v92
    %684 = vmatpush1.msra.mxu0 %v91
    %685 = vmatprep.subr.mxu0 %v95
    %686 = vmatpush1.msra.mxu0 %v94
    %687 = vmatprep.subr.mxu0 0.0
    %688 = vmatpush1.msra.mxu0 0.0
    %689 = vmatprep.subr.mxu0 0.0
    %690 = vmatpush1.msra.mxu0 0.0
    %691 = vmatprep.subr.mxu0 0.0
    %692 = vmatpush1.msra.mxu0 0.0
    %693 = vmatprep.subr.mxu0 0.0
    %694 = vmatpush1.msra.mxu0 0.0
    %695 = vmatprep.subr.mxu0 0.0
    %696 = vmatpush1.msra.mxu0 0.0
    %697 = vmatprep.subr.mxu0 0.0
    %698 = vmatpush1.msra.mxu0 0.0
    %699 = vmatprep.subr.mxu0 0.0
    %700 = vmatpush1.msra.mxu0 0.0
    %701 = vmatprep.subr.mxu0 0.0
    %702 = vmatpush1.msra.mxu0 0.0
    %703 = vmatprep.subr.mxu0 0.0
    %704 = vmatpush1.msra.mxu0 0.0
    %705 = vmatprep.subr.mxu0 0.0
    %706 = vmatpush1.msra.mxu0 0.0
    %707 = vmatprep.subr.mxu0 0.0
    %708 = vmatpush1.msra.mxu0 0.0
    %709 = vmatprep.subr.mxu0 0.0
    %710 = vmatpush1.msra.mxu0 0.0
    %711 = vmatprep.subr.mxu0 0.0
    %712 = vmatpush1.msra.mxu0 0.0
    %713 = vmatprep.subr.mxu0 0.0
    %714 = vmatpush1.msra.mxu0 0.0
    %715 = vmatprep.subr.mxu0 0.0
    %716 = vmatpush1.msra.mxu0 0.0
    %717 = vmatprep.subr.mxu0 0.0
    %718 = vmatpush1.msra.mxu0 0.0
    %719 = vmatprep.mubr.f32.mxu0 0.0
    %720 = vmatmul.mubr.f32.gmra.mrb[0].mxu0 %v647
    %v721 = vpop.f32.mrb[0].mxu0
    %v722 = vadd.f32 %v112, %v721
    %v723 = vpop.f32.mrb[0].mxu0
    %v724 = vadd.f32 %v116, %v723
    %725 = vmatprep.mubr.f32.mxu0 0.0
    %726 = vmatmul.mubr.f32.gmra.mrb[0].mxu0 %v648
    %v727 = vpop.f32.mrb[0].mxu0
    %v728 = vadd.f32 %v112, %v727
    %v729 = vpop.f32.mrb[0].mxu0
    %v730 = vadd.f32 %v116, %v729
    %731 = vmatprep.mubr.f32.mxu0 0.0
    %732 = vmatmul.mubr.f32.gmra.mrb[0].mxu0 %v649
    %v733 = vpop.f32.mrb[0].mxu0
    %v734 = vadd.f32 %v112, %v733
    %v735 = vpop.f32.mrb[0].mxu0
    %v736 = vadd.f32 %v116, %v735
    %737 = vmatprep.mubr.f32.mxu0 0.0
    %738 = vmatmul.mubr.f32.gmra.mrb[0].mxu0 %v650
    %v739 = vpop.f32.mrb[0].mxu0
    %v740 = vadd.f32 %v112, %v739
    %v741 = vpop.f32.mrb[0].mxu0
    %v742 = vadd.f32 %v116, %v741
    %743 = vmatprep.mubr.f32.mxu0 0.0
    %744 = vmatmul.mubr.f32.gmra.mrb[0].mxu0 %v651
    %v745 = vpop.f32.mrb[0].mxu0
    %v746 = vadd.f32 %v112, %v745
    %v747 = vpop.f32.mrb[0].mxu0
    %v748 = vadd.f32 %v116, %v747
    %749 = vmatprep.mubr.f32.mxu0 0.0
    %750 = vmatmul.mubr.f32.gmra.mrb[0].mxu0 %v652
    %v751 = vpop.f32.mrb[0].mxu0
    %v752 = vadd.f32 %v112, %v751
    %v753 = vpop.f32.mrb[0].mxu0
    %v754 = vadd.f32 %v116, %v753
    %755 = vmatprep.mubr.f32.mxu0 0.0
    %756 = vmatmul.mubr.f32.gmra.mrb[0].mxu0 %v653
    %v757 = vpop.f32.mrb[0].mxu0
    %v758 = vadd.f32 %v112, %v757
    %v759 = vpop.f32.mrb[0].mxu0
    %v760 = vadd.f32 %v116, %v759
    %761 = vmatprep.mubr.f32.mxu0 0.0
    %762 = vmatmul.mubr.f32.gmra.mrb[0].mxu0 %v654
    %v763 = vpop.f32.mrb[0].mxu0
    %v764 = vadd.f32 %v112, %v763
    %v765 = vpop.f32.mrb[0].mxu0
    %v766 = vadd.f32 %v116, %v765
    %767 = vdwg.mxu0
    %768 = vmatprep.subr.mxu0 0.0
    %769 = vmatpush1.msra.mxu0 %v51
    %770 = vmatprep.subr.mxu0 0.0
    %771 = vmatpush1.msra.mxu0 %v54
    %772 = vmatprep.subr.mxu0 0.0
    %773 = vmatpush1.msra.mxu0 %v57
    %774 = vmatprep.subr.mxu0 0.0
    %775 = vmatpush1.msra.mxu0 %v60
    %776 = vmatprep.subr.mxu0 0.0
    %777 = vmatpush1.msra.mxu0 %v63
    %778 = vmatprep.subr.mxu0 0.0
    %779 = vmatpush1.msra.mxu0 %v66
    %780 = vmatprep.subr.mxu0 0.0
    %781 = vmatpush1.msra.mxu0 %v69
    %782 = vmatprep.subr.mxu0 0.0
    %783 = vmatpush1.msra.mxu0 %v72
    %784 = vmatprep.subr.mxu0 0.0
    %785 = vmatpush1.msra.mxu0 %v75
    %786 = vmatprep.subr.mxu0 0.0
    %787 = vmatpush1.msra.mxu0 %v78
    %788 = vmatprep.subr.mxu0 0.0
    %789 = vmatpush1.msra.mxu0 %v81
    %790 = vmatprep.subr.mxu0 0.0
    %791 = vmatpush1.msra.mxu0 %v84
    %792 = vmatprep.subr.mxu0 0.0
    %793 = vmatpush1.msra.mxu0 %v87
    %794 = vmatprep.subr.mxu0 0.0
    %795 = vmatpush1.msra.mxu0 %v90
    %796 = vmatprep.subr.mxu0 0.0
    %797 = vmatpush1.msra.mxu0 %v93
    %798 = vmatprep.subr.mxu0 0.0
    %799 = vmatpush1.msra.mxu0 %v96
    %800 = vmatprep.subr.mxu0 0.0
    %801 = vmatpush1.msra.mxu0 0.0
    %802 = vmatprep.subr.mxu0 0.0
    %803 = vmatpush1.msra.mxu0 0.0
    %804 = vmatprep.subr.mxu0 0.0
    %805 = vmatpush1.msra.mxu0 0.0
    %806 = vmatprep.subr.mxu0 0.0
    %807 = vmatpush1.msra.mxu0 0.0
    %808 = vmatprep.subr.mxu0 0.0
    %809 = vmatpush1.msra.mxu0 0.0
    %810 = vmatprep.subr.mxu0 0.0
    %811 = vmatpush1.msra.mxu0 0.0
    %812 = vmatprep.subr.mxu0 0.0
    %813 = vmatpush1.msra.mxu0 0.0
    %814 = vmatprep.subr.mxu0 0.0
    %815 = vmatpush1.msra.mxu0 0.0
    %816 = vmatprep.subr.mxu0 0.0
    %817 = vmatpush1.msra.mxu0 0.0
    %818 = vmatprep.subr.mxu0 0.0
    %819 = vmatpush1.msra.mxu0 0.0
    %820 = vmatprep.subr.mxu0 0.0
    %821 = vmatpush1.msra.mxu0 0.0
    %822 = vmatprep.subr.mxu0 0.0
    %823 = vmatpush1.msra.mxu0 0.0
    %824 = vmatprep.subr.mxu0 0.0
    %825 = vmatpush1.msra.mxu0 0.0
    %826 = vmatprep.subr.mxu0 0.0
    %827 = vmatpush1.msra.mxu0 0.0
    %828 = vmatprep.subr.mxu0 0.0
    %829 = vmatpush1.msra.mxu0 0.0
    %830 = vmatprep.subr.mxu0 0.0
    %831 = vmatpush1.msra.mxu0 0.0
    %832 = vmatprep.mubr.f32.mxu0 0.0
    %833 = vmatmul.mubr.f32.gmra.mrb[0].mxu0 %v647
    %v834 = vpop.f32.mrb[0].mxu0
    %v835 = vadd.f32 %v120, %v834
    %v836 = vpop.f32.mrb[0].mxu0
    %837 = vmatprep.mubr.f32.mxu0 0.0
    %838 = vmatmul.mubr.f32.gmra.mrb[0].mxu0 %v648
    %v839 = vpop.f32.mrb[0].mxu0
    %v840 = vadd.f32 %v120, %v839
    %v841 = vpop.f32.mrb[0].mxu0
    %842 = vmatprep.mubr.f32.mxu0 0.0
    %843 = vmatmul.mubr.f32.gmra.mrb[0].mxu0 %v649
    %v844 = vpop.f32.mrb[0].mxu0
    %v845 = vadd.f32 %v120, %v844
    %v846 = vpop.f32.mrb[0].mxu0
    %847 = vmatprep.mubr.f32.mxu0 0.0
    %848 = vmatmul.mubr.f32.gmra.mrb[0].mxu0 %v650
    %v849 = vpop.f32.mrb[0].mxu0
    %v850 = vadd.f32 %v120, %v849
    %v851 = vpop.f32.mrb[0].mxu0
    %852 = vmatprep.mubr.f32.mxu0 0.0
    %853 = vmatmul.mubr.f32.gmra.mrb[0].mxu0 %v651
    %v854 = vpop.f32.mrb[0].mxu0
    %v855 = vadd.f32 %v120, %v854
    %v856 = vpop.f32.mrb[0].mxu0
    %857 = vmatprep.mubr.f32.mxu0 0.0
    %858 = vmatmul.mubr.f32.gmra.mrb[0].mxu0 %v652
    %v859 = vpop.f32.mrb[0].mxu0
    %v860 = vadd.f32 %v120, %v859
    %v861 = vpop.f32.mrb[0].mxu0
    %862 = vmatprep.mubr.f32.mxu0 0.0
    %863 = vmatmul.mubr.f32.gmra.mrb[0].mxu0 %v653
    %v864 = vpop.f32.mrb[0].mxu0
    %v865 = vadd.f32 %v120, %v864
    %v866 = vpop.f32.mrb[0].mxu0
    %867 = vmatprep.mubr.f32.mxu0 0.0
    %868 = vmatmul.mubr.f32.gmra.mrb[0].mxu0 %v654
    %v869 = vpop.f32.mrb[0].mxu0
    %v870 = vadd.f32 %v120, %v869
    %v871 = vpop.f32.mrb[0].mxu0
    %872 = vdwg.mxu0
    %873 = vmatprep.subr.mxu0 0.0
    %874 = vmatpush1.xpose.msra.mxu0 %v724
    %875 = vmatprep.subr.mxu0 0.0
    %876 = vmatpush1.xpose.msra.mxu0 %v730
    %877 = vmatprep.subr.mxu0 0.0
    %878 = vmatpush1.xpose.msra.mxu0 %v736
    %879 = vmatprep.subr.mxu0 0.0
    %880 = vmatpush1.xpose.msra.mxu0 %v742
    %881 = vmatprep.subr.mxu0 0.0
    %882 = vmatpush1.xpose.msra.mxu0 %v748
    %883 = vmatprep.subr.mxu0 0.0
    %884 = vmatpush1.xpose.msra.mxu0 %v754
    %885 = vmatprep.subr.mxu0 0.0
    %886 = vmatpush1.xpose.msra.mxu0 %v760
    %887 = vmatprep.subr.mxu0 0.0
    %888 = vmatpush1.xpose.msra.mxu0 %v766
    %889 = vmatprep.subr.mxu0 0.0
    %890 = vmatpush1.xpose.msra.mxu0 0.0
    %891 = vmatprep.subr.mxu0 0.0
    %892 = vmatpush1.xpose.msra.mxu0 0.0
    %893 = vmatprep.subr.mxu0 0.0
    %894 = vmatpush1.xpose.msra.mxu0 0.0
    %895 = vmatprep.subr.mxu0 0.0
    %896 = vmatpush1.xpose.msra.mxu0 0.0
    %897 = vmatprep.subr.mxu0 0.0
    %898 = vmatpush1.xpose.msra.mxu0 0.0
    %899 = vmatprep.subr.mxu0 0.0
    %900 = vmatpush1.xpose.msra.mxu0 0.0
    %901 = vmatprep.subr.mxu0 0.0
    %902 = vmatpush1.xpose.msra.mxu0 0.0
    %903 = vmatprep.subr.mxu0 0.0
    %904 = vmatpush1.xpose.msra.mxu0 0.0
    %905 = vmatprep.subr.mxu0 0.0
    %906 = vmatpush1.xpose.msra.mxu0 0.0
    %907 = vmatprep.subr.mxu0 0.0
    %908 = vmatpush1.xpose.msra.mxu0 0.0
    %909 = vmatprep.subr.mxu0 0.0
    %910 = vmatpush1.xpose.msra.mxu0 0.0
    %911 = vmatprep.subr.mxu0 0.0
    %912 = vmatpush1.xpose.msra.mxu0 0.0
    %913 = vmatprep.subr.mxu0 0.0
    %914 = vmatpush1.xpose.msra.mxu0 0.0
    %915 = vmatprep.subr.mxu0 0.0
    %916 = vmatpush1.xpose.msra.mxu0 0.0
    %917 = vmatprep.subr.mxu0 0.0
    %918 = vmatpush1.xpose.msra.mxu0 0.0
    %919 = vmatprep.subr.mxu0 0.0
    %920 = vmatpush1.xpose.msra.mxu0 0.0
    %921 = vmatprep.subr.mxu0 0.0
    %922 = vmatpush1.xpose.msra.mxu0 0.0
    %923 = vmatprep.subr.mxu0 0.0
    %924 = vmatpush1.xpose.msra.mxu0 0.0
    %925 = vmatprep.subr.mxu0 0.0
    %926 = vmatpush1.xpose.msra.mxu0 0.0
    %927 = vmatprep.subr.mxu0 0.0
    %928 = vmatpush1.xpose.msra.mxu0 0.0
    %929 = vmatprep.subr.mxu0 0.0
    %930 = vmatpush1.xpose.msra.mxu0 0.0
    %931 = vmatprep.subr.mxu0 0.0
    %932 = vmatpush1.xpose.msra.mxu0 0.0
    %933 = vmatprep.subr.mxu0 0.0
    %934 = vmatpush1.xpose.msra.mxu0 0.0
    %935 = vmatprep.subr.mxu0 0.0
    %936 = vmatpush1.xpose.msra.mxu0 0.0
    %937 = vmatprep.mubr.f32.mxu0 0.0
    %938 = vmatmul.mubr.f32.gmra.mrb[0].mxu0 %v722
    %v939 = vpop.f32.mrb[0].mxu0
    %v940 = vadd.f32 0.0, %v939
    %v941 = vpop.f32.mrb[0].mxu0
    %942 = vmatprep.mubr.f32.mxu0 0.0
    %943 = vmatmul.mubr.f32.gmra.mrb[0].mxu0 %v728
    %v944 = vpop.f32.mrb[0].mxu0
    %v945 = vadd.f32 0.0, %v944
    %v946 = vpop.f32.mrb[0].mxu0
    %947 = vmatprep.mubr.f32.mxu0 0.0
    %948 = vmatmul.mubr.f32.gmra.mrb[0].mxu0 %v734
    %v949 = vpop.f32.mrb[0].mxu0
    %v950 = vadd.f32 0.0, %v949
    %v951 = vpop.f32.mrb[0].mxu0
    %952 = vmatprep.mubr.f32.mxu0 0.0
    %953 = vmatmul.mubr.f32.gmra.mrb[0].mxu0 %v740
    %v954 = vpop.f32.mrb[0].mxu0
    %v955 = vadd.f32 0.0, %v954
    %v956 = vpop.f32.mrb[0].mxu0
    %957 = vmatprep.mubr.f32.mxu0 0.0
    %958 = vmatmul.mubr.f32.gmra.mrb[0].mxu0 %v746
    %v959 = vpop.f32.mrb[0].mxu0
    %v960 = vadd.f32 0.0, %v959
    %v961 = vpop.f32.mrb[0].mxu0
    %962 = vmatprep.mubr.f32.mxu0 0.0
    %963 = vmatmul.mubr.f32.gmra.mrb[0].mxu0 %v752
    %v964 = vpop.f32.mrb[0].mxu0
    %v965 = vadd.f32 0.0, %v964
    %v966 = vpop.f32.mrb[0].mxu0
    %967 = vmatprep.mubr.f32.mxu0 0.0
    %968 = vmatmul.mubr.f32.gmra.mrb[0].mxu0 %v758
    %v969 = vpop.f32.mrb[0].mxu0
    %v970 = vadd.f32 0.0, %v969
    %v971 = vpop.f32.mrb[0].mxu0
    %972 = vmatprep.mubr.f32.mxu0 0.0
    %973 = vmatmul.mubr.f32.gmra.mrb[0].mxu0 %v764
    %v974 = vpop.f32.mrb[0].mxu0
    %v975 = vadd.f32 0.0, %v974
    %v976 = vpop.f32.mrb[0].mxu0
    %977 = vdwg.mxu0
    %v978 = vsel %vm447, %v940, -inf
    %979 = vmax.xlane.f32.xlu0 %v978
    %v980 = vpop.xlane.xlu0 %979
    %v981 = vsel %vm447, %v945, -inf
    %982 = vmax.xlane.f32.xlu0 %v981
    %v983 = vpop.xlane.xlu0 %982
    %v984 = vsel %vm447, %v950, -inf
    %985 = vmax.xlane.f32.xlu0 %v984
    %v986 = vpop.xlane.xlu0 %985
    %v987 = vsel %vm447, %v955, -inf
    %988 = vmax.xlane.f32.xlu0 %v987
    %v989 = vpop.xlane.xlu0 %988
    %v990 = vsel %vm447, %v960, -inf
    %991 = vmax.xlane.f32.xlu0 %v990
    %v992 = vpop.xlane.xlu0 %991
    %v993 = vsel %vm447, %v965, -inf
    %994 = vmax.xlane.f32.xlu0 %v993
    %v995 = vpop.xlane.xlu0 %994
    %v996 = vsel %vm447, %v970, -inf
    %997 = vmax.xlane.f32.xlu0 %v996
    %v998 = vpop.xlane.xlu0 %997
    %v999 = vsel %vm447, %v975, -inf
    %1000 = vmax.xlane.f32.xlu0 %v999
    %v1001 = vpop.xlane.xlu0 %1000
    %v1002 = vsub.f32 %v940, %v980
    %v1003 = vsub.f32 %v945, %v983
    %v1004 = vsub.f32 %v950, %v986
    %v1005 = vsub.f32 %v955, %v989
    %v1006 = vsub.f32 %v960, %v992
    %v1007 = vsub.f32 %v965, %v995
    %v1008 = vsub.f32 %v970, %v998
    %v1009 = vsub.f32 %v975, %v1001
    %v1010 = vmul.f32 %v1002, 1.442695
    %v1011 = vpow.pop %v1010
    %v1012 = vmul.f32 %v1003, 1.442695
    %v1013 = vpow.pop %v1012
    %v1014 = vmul.f32 %v1004, 1.442695
    %v1015 = vpow.pop %v1014
    %v1016 = vmul.f32 %v1005, 1.442695
    %v1017 = vpow.pop %v1016
    %v1018 = vmul.f32 %v1006, 1.442695
    %v1019 = vpow.pop %v1018
    %v1020 = vmul.f32 %v1007, 1.442695
    %v1021 = vpow.pop %v1020
    %v1022 = vmul.f32 %v1008, 1.442695
    %v1023 = vpow.pop %v1022
    %v1024 = vmul.f32 %v1009, 1.442695
    %v1025 = vpow.pop %v1024
    %v1026 = vsel %vm447, %v1011, 0.0
    %1027 = vadd.xlane.f32.xlu0 %v1026
    %v1028 = vpop.xlane.xlu0 %1027
    %v1029 = vsel %vm447, %v1013, 0.0
    %1030 = vadd.xlane.f32.xlu0 %v1029
    %v1031 = vpop.xlane.xlu0 %1030
    %v1032 = vsel %vm447, %v1015, 0.0
    %1033 = vadd.xlane.f32.xlu0 %v1032
    %v1034 = vpop.xlane.xlu0 %1033
    %v1035 = vsel %vm447, %v1017, 0.0
    %1036 = vadd.xlane.f32.xlu0 %v1035
    %v1037 = vpop.xlane.xlu0 %1036
    %v1038 = vsel %vm447, %v1019, 0.0
    %1039 = vadd.xlane.f32.xlu0 %v1038
    %v1040 = vpop.xlane.xlu0 %1039
    %v1041 = vsel %vm447, %v1021, 0.0
    %1042 = vadd.xlane.f32.xlu0 %v1041
    %v1043 = vpop.xlane.xlu0 %1042
    %v1044 = vsel %vm447, %v1023, 0.0
    %1045 = vadd.xlane.f32.xlu0 %v1044
    %v1046 = vpop.xlane.xlu0 %1045
    %v1047 = vsel %vm447, %v1025, 0.0
    %1048 = vadd.xlane.f32.xlu0 %v1047
    %v1049 = vpop.xlane.xlu0 %1048
    %v1050 = vrcp.pop %v1028
    %v1051 = vrcp.pop %v1031
    %v1052 = vrcp.pop %v1034
    %v1053 = vrcp.pop %v1037
    %v1054 = vrcp.pop %v1040
    %v1055 = vrcp.pop %v1043
    %v1056 = vrcp.pop %v1046
    %v1057 = vrcp.pop %v1049
    %v1058 = vmul.f32 %v1011, %v1050
    %v1059 = vmul.f32 %v1013, %v1051
    %v1060 = vmul.f32 %v1015, %v1052
    %v1061 = vmul.f32 %v1017, %v1053
    %v1062 = vmul.f32 %v1019, %v1054
    %v1063 = vmul.f32 %v1021, %v1055
    %v1064 = vmul.f32 %v1023, %v1056
    %v1065 = vmul.f32 %v1025, %v1057
    %v1066 = vpack.c.bf16 %v1059, %v1058
    %v1067 = vpack.c.bf16 %v1061, %v1060
    %v1068 = vpack.c.bf16 %v1063, %v1062
    %v1069 = vpack.c.bf16 %v1065, %v1064
    %v1070 = vpack.c.bf16 %v840, %v835
    %v1071 = vpack.c.bf16 %v850, %v845
    %v1072 = vpack.c.bf16 %v860, %v855
    %v1073 = vpack.c.bf16 %v870, %v865
    %v1075 = vsel %vm447, %v1066, 0
    %v1078 = vsel %vm447, %v1067, 0
    %v1081 = vsel %vm447, %v1068, 0
    %v1084 = vsel %vm447, %v1069, 0
    %1086 = vmatprep.subr.bf16.mxu0 0
    %1087 = vmatpush1.bf16.msra.mxu0 %v1070
    %1088 = vmatprep.subr.bf16.mxu0 0
    %1089 = vmatpush1.bf16.msra.mxu0 %v1071
    %1090 = vmatprep.subr.bf16.mxu0 0
    %1091 = vmatpush1.bf16.msra.mxu0 %v1072
    %1092 = vmatprep.subr.bf16.mxu0 0
    %1093 = vmatpush1.bf16.msra.mxu0 %v1073
    %1094 = vmatprep.subr.bf16.mxu0 0
    %1095 = vmatpush1.bf16.msra.mxu0 0
    %1096 = vmatprep.subr.bf16.mxu0 0
    %1097 = vmatpush1.bf16.msra.mxu0 0
    %1098 = vmatprep.subr.bf16.mxu0 0
    %1099 = vmatpush1.bf16.msra.mxu0 0
    %1100 = vmatprep.subr.bf16.mxu0 0
    %1101 = vmatpush1.bf16.msra.mxu0 0
    %1102 = vmatprep.subr.bf16.mxu0 0
    %1103 = vmatpush1.bf16.msra.mxu0 0
    %1104 = vmatprep.subr.bf16.mxu0 0
    %1105 = vmatpush1.bf16.msra.mxu0 0
    %1106 = vmatprep.subr.bf16.mxu0 0
    %1107 = vmatpush1.bf16.msra.mxu0 0
    %1108 = vmatprep.subr.bf16.mxu0 0
    %1109 = vmatpush1.bf16.msra.mxu0 0
    %1110 = vmatprep.subr.bf16.mxu0 0
    %1111 = vmatpush1.bf16.msra.mxu0 0
    %1112 = vmatprep.subr.bf16.mxu0 0
    %1113 = vmatpush1.bf16.msra.mxu0 0
    %1114 = vmatprep.subr.bf16.mxu0 0
    %1115 = vmatpush1.bf16.msra.mxu0 0
    %1116 = vmatprep.subr.bf16.mxu0 0
    %1117 = vmatpush1.bf16.msra.mxu0 0
    %1118 = vmatprep.mubr.bf16.mxu0 0
    %1119 = vmatmul.mubr.bf16.gmra.mrb[0].mxu0 %v1075
    %v1120 = vpop.f32.mrb[0].mxu0
    %v1121 = vadd.f32 0.0, %v1120
    %v1122 = vpop.f32.mrb[0].mxu0
    %v1123 = vpop.f32.mrb[0].mxu0
    %v1124 = vadd.f32 0.0, %v1123
    %v1125 = vpop.f32.mrb[0].mxu0
    %1126 = vmatprep.mubr.bf16.mxu0 0
    %1127 = vmatmul.mubr.bf16.gmra.mrb[0].mxu0 %v1078
    %v1128 = vpop.f32.mrb[0].mxu0
    %v1129 = vadd.f32 0.0, %v1128
    %v1130 = vpop.f32.mrb[0].mxu0
    %v1131 = vpop.f32.mrb[0].mxu0
    %v1132 = vadd.f32 0.0, %v1131
    %v1133 = vpop.f32.mrb[0].mxu0
    %1134 = vmatprep.mubr.bf16.mxu0 0
    %1135 = vmatmul.mubr.bf16.gmra.mrb[0].mxu0 %v1081
    %v1136 = vpop.f32.mrb[0].mxu0
    %v1137 = vadd.f32 0.0, %v1136
    %v1138 = vpop.f32.mrb[0].mxu0
    %v1139 = vpop.f32.mrb[0].mxu0
    %v1140 = vadd.f32 0.0, %v1139
    %v1141 = vpop.f32.mrb[0].mxu0
    %1142 = vmatprep.mubr.bf16.mxu0 0
    %1143 = vmatmul.mubr.bf16.gmra.mrb[0].mxu0 %v1084
    %v1144 = vpop.f32.mrb[0].mxu0
    %v1145 = vadd.f32 0.0, %v1144
    %v1146 = vpop.f32.mrb[0].mxu0
    %v1147 = vpop.f32.mrb[0].mxu0
    %v1148 = vadd.f32 0.0, %v1147
    %v1149 = vpop.f32.mrb[0].mxu0
    %1150 = vdwg.mxu0
    %v1151 = vmul.f32 %v621, %v1121
    %v1152 = vmul.f32 %v621, %v1124
    %v1153 = vmul.f32 %v621, %v1129
    %v1154 = vmul.f32 %v621, %v1132
    %v1155 = vmul.f32 %v621, %v1137
    %v1156 = vmul.f32 %v621, %v1140
    %v1157 = vmul.f32 %v621, %v1145
    %v1158 = vmul.f32 %v621, %v1148
    %v1159 = vadd.f32 %v1151, %v647
    %v1160 = vadd.f32 %v1152, %v648
    %v1161 = vadd.f32 %v1153, %v649
    %v1162 = vadd.f32 %v1154, %v650
    %v1163 = vadd.f32 %v1155, %v651
    %v1164 = vadd.f32 %v1156, %v652
    %v1165 = vadd.f32 %v1157, %v653
    %v1166 = vadd.f32 %v1158, %v654
    %s1167 = scalar_lea.vmem [#allocation8], 64
    %1168 = vst [vmem:[%s1167] sm:$0xff] %v1159
    %1169 = vst [vmem:[%s1167 + $0x8] sm:$0xff] %v1160
    %1170 = vst [vmem:[%s1167 + $0x10] sm:$0xff] %v1161
    %1171 = vst [vmem:[%s1167 + $0x18] sm:$0xff] %v1162
    %1172 = vst [vmem:[%s1167 + $0x20] sm:$0xff] %v1163
    %1173 = vst [vmem:[%s1167 + $0x28] sm:$0xff] %v1164
    %1174 = vst [vmem:[%s1167 + $0x30] sm:$0xff] %v1165
    %1175 = vst [vmem:[%s1167 + $0x38] sm:$0xff] %v1166
    // Predicated region
    $region26: #{tpu_custom_call.1} parent=1 // pred_check
      _
    $region27: #{tpu_custom_call.1} parent=1 // pred_check_branch
      %1177 = sbr.rel (0) target = $region29
    $region28: #{tpu_custom_call.1} parent=1 // pred_region
      %s1179 = ssub.s32 2048, 2048
      %1180 = vsyncadd [#allocation5], %s1179
      %s1181 = sshll.u32 [#allocation8], 4
      %s1182 = int_to_ptr.vmem [resolvable:$true] %s1181
      %1187 = dma.vmem_to_hbm [thread:$0]  %s1182, 2048, %s4, [#allocation5], 128, 128, 8
    $region29: #{tpu_custom_call.1} parent=1 // pred_fallthru
      _
    // Predicated region
    $region30: #{tpu_custom_call.1} parent=1 // pred_check
      _
    $region31: #{tpu_custom_call.1} parent=1 // pred_check_branch
      %1189 = sbr.rel (0) target = $region33
    $region32: #{tpu_custom_call.1} parent=1 // pred_region
      %1190 = dma.done [#allocation5], 2048
    $region33: #{tpu_custom_call.1} parent=1 // pred_fallthru
      _
    %1191 = vsyncpa [#allocation4], 1
    %1192 = vsyncpa [#allocation7], 1
    %1193 = vsyncpa [#allocation5], 1

</llo_original>
